<compile_context>
chip_gen: v5e
topology: v5e:2x2
jax: 0.10.0
libtpu: 0.0.40
codegen_flags: <defaults>
</compile_context>

<pallas_src>
import math
import functools

import jax
import jax.numpy as jnp
from jax.experimental import pallas as pl
from jax.experimental.pallas import tpu as pltpu


# ----------------------------- Pallas kernels ------------------------------

def _align_conv_kernel(x_ref, w_ref, b_ref, o_ref):
    # x : (Ki, N)  = (B*c_in, T*V)   batch folded into sublanes
    # w : (Mo, Ki) = (B*c_out, B*c_in) block-diagonal kron(I_B, W)
    # b : (Mo, 1)
    # o : (Mo, N)  lane-dense output (N = T*V = 256)
    x = x_ref[...]
    w = w_ref[...]
    mo = w.shape[0]
    ki = x.shape[0]
    n = x.shape[1]
    # Bias broadcast hoisted once (JAX does not CSE broadcast_in_dim).
    acc = jnp.broadcast_to(b_ref[...], (mo, n)).astype(jnp.float32)
    # Tiny-K contraction on the VPU: Ki unrolled multiply-accumulates of
    # (Mo,1)x(1,N) broadcasts.  Avoids an MXU pass that would be <0.1% utilized.
    for k in range(ki):
        acc = acc + w[:, k:k + 1] * x[k:k + 1, :]
    o_ref[...] = acc.astype(o_ref.dtype)


def _align_pad_kernel(x_ref, o_ref):
    # x : (B, c_in, N)   o : (B, c_out, N)
    # Two direct stores (copy + zero) instead of a sublane concatenate.
    b, c_in, n = x_ref.shape
    c_out = o_ref.shape[1]
    o_ref[:, :c_in, :] = x_ref[...]
    o_ref[:, c_in:, :] = jnp.zeros((b, c_out - c_in, n), dtype=o_ref.dtype)


# ----------------------------- wrappers ------------------------------------

_VMEM_SPEC = pl.BlockSpec(memory_space=pltpu.MemorySpace.VMEM)


def align_conv_1x1(x_nchw, w, b):
    # x: [B, Cin, T, V], w: [Cout, Cin] (Conv2d (1,1) weight squeezed), b: [Cout]
    B, c_in, T, V = x_nchw.shape
    c_out = w.shape[0]
    N = T * V

    # Fold batch into the sublane dimension; build the block-diagonal weight
    # and tiled bias in the wrapper (tiny, fuses under jit).
    x2 = x_nchw.reshape(B * c_in, N)                            # (8, 256)
    w_blk = jnp.kron(jnp.eye(B, dtype=w.dtype), w)              # (B*c_out, B*c_in)
    b_blk = jnp.tile(b, B).reshape(B * c_out, 1)                # (B*c_out, 1)

    out = pl.pallas_call(
        _align_conv_kernel,
        out_shape=jax.ShapeDtypeStruct((B * c_out, N), jnp.float32),
        in_specs=[_VMEM_SPEC, _VMEM_SPEC, _VMEM_SPEC],
        out_specs=_VMEM_SPEC,
    )(x2, w_blk, b_blk)
    # (B*c_out, N) is row-major contiguous with (B, c_out, T, V): free reshape.
    return out.reshape(B, c_out, T, V)


def align_zero_pad(x_nchw, c_out):
    B, c_in, T, V = x_nchw.shape
    N = T * V
    x2 = x_nchw.reshape(B, c_in, N)
    out = pl.pallas_call(
        _align_pad_kernel,
        out_shape=jax.ShapeDtypeStruct((B, c_out, N), jnp.float32),
        in_specs=[_VMEM_SPEC],
        out_specs=_VMEM_SPEC,
    )(x2)
    return out.reshape(B, c_out, T, V)


def align_forward(x, w=None, b=None, *, c_in, c_out):
    """Forward pass of Align(c_in, c_out) on NCHW input x."""
    assert x.shape[1] == c_in
    if c_in > c_out:
        return align_conv_1x1(x, w, b)        # align_conv = nn.Conv2d(c_in, c_out, (1,1))
    elif c_in < c_out:
        return align_zero_pad(x, c_out)       # torch.cat([x, zeros], dim=1)
    else:
        return x                              # identity branch


# ----------------------------- main -----------------------------------------

if __name__ == "__main__":
    B, T, V = 2, 16, 16
    c_in = 4

    key = jax.random.PRNGKey(0)
    kx, kw, kb = jax.random.split(key, 3)
    x = jax.random.normal(kx, (B, c_in, T, V), jnp.float32)

    # --- branch 1: c_in > c_out  (1x1 conv path, Pallas VPU-MAC kernel) ---
    c_out_small = 2
    bound = 1.0 / math.sqrt(c_in)              # PyTorch Conv2d default init bound
    w = jax.random.uniform(kw, (c_out_small, c_in), jnp.float32, -bound, bound)
    b = jax.random.uniform(kb, (c_out_small,), jnp.float32, -bound, bound)

    conv_fwd = jax.jit(functools.partial(align_forward, c_in=c_in, c_out=c_out_small))
    y_conv = jax.block_until_ready(conv_fwd(x, w, b))
    assert y_conv.shape == (B, c_out_small, T, V), y_conv.shape
    y_ref = jnp.einsum('oc,bctv->botv', w, x) + b[None, :, None, None]
    assert bool(jnp.allclose(y_conv, y_ref, rtol=1e-5, atol=1e-5))

    # --- branch 2: c_in < c_out  (zero-pad path, Pallas two-store kernel) ---
    c_out_big = 8
    pad_fwd = jax.jit(functools.partial(align_forward, c_in=c_in, c_out=c_out_big))
    y_pad = jax.block_until_ready(pad_fwd(x))
    assert y_pad.shape == (B, c_out_big, T, V), y_pad.shape
    assert bool(jnp.allclose(y_pad[:, :c_in], x))
    assert bool(jnp.all(y_pad[:, c_in:] == 0.0))

    # --- branch 3: c_in == c_out (identity) ---
    id_fwd = jax.jit(functools.partial(align_forward, c_in=c_in, c_out=c_in))
    y_id = jax.block_until_ready(id_fwd(x))
    assert bool(jnp.array_equal(y_id, x))

    assert bool(jnp.all(jnp.isfinite(y_conv))) and bool(jnp.all(jnp.isfinite(y_pad)))
    print("KERNEL_OK")
</pallas_src>

<mosaic_0001>
module attributes {stable_mosaic.version = 11 : i64} {
  func.func @_align_conv_kernel(%arg0: memref<8x256xf32, #tpu.memory_space<vmem>>, %arg1: memref<4x8xf32, #tpu.memory_space<vmem>>, %arg2: memref<4x1xf32, #tpu.memory_space<vmem>>, %arg3: memref<4x256xf32, #tpu.memory_space<vmem>>) attributes {dimension_semantics = [], scalar_prefetch = 0 : i64, scratch_operands = 0 : i64, tpu.core_type = #tpu.core_type<tc>} {
    %c0 = arith.constant 0 : index
    %c0_0 = arith.constant 0 : index
    %0 = vector.load %arg0[%c0, %c0_0] : memref<8x256xf32, #tpu.memory_space<vmem>>, vector<8x256xf32>
    %c0_1 = arith.constant 0 : index
    %c0_2 = arith.constant 0 : index
    %1 = vector.load %arg1[%c0_1, %c0_2] : memref<4x8xf32, #tpu.memory_space<vmem>>, vector<4x8xf32>
    %c0_3 = arith.constant 0 : index
    %c0_4 = arith.constant 0 : index
    %2 = vector.load %arg2[%c0_3, %c0_4] : memref<4x1xf32, #tpu.memory_space<vmem>>, vector<4x1xf32>
    %3 = vector.shape_cast %2 : vector<4x1xf32> to vector<4x1xf32>
    %4 = vector.broadcast %3 : vector<4x1xf32> to vector<4x256xf32>
    %5 = vector.extract_strided_slice %1 {offsets = [0, 0], sizes = [4, 1], strides = [1, 1]} : vector<4x8xf32> to vector<4x1xf32>
    %6 = vector.extract_strided_slice %0 {offsets = [0, 0], sizes = [1, 256], strides = [1, 1]} : vector<8x256xf32> to vector<1x256xf32>
    %7 = vector.broadcast %5 : vector<4x1xf32> to vector<4x256xf32>
    %8 = vector.broadcast %6 : vector<1x256xf32> to vector<4x256xf32>
    %9 = arith.mulf %7, %8 : vector<4x256xf32>
    %10 = arith.addf %4, %9 : vector<4x256xf32>
    %11 = vector.extract_strided_slice %1 {offsets = [0, 1], sizes = [4, 1], strides = [1, 1]} : vector<4x8xf32> to vector<4x1xf32>
    %12 = vector.extract_strided_slice %0 {offsets = [1, 0], sizes = [1, 256], strides = [1, 1]} : vector<8x256xf32> to vector<1x256xf32>
    %13 = vector.broadcast %11 : vector<4x1xf32> to vector<4x256xf32>
    %14 = vector.broadcast %12 : vector<1x256xf32> to vector<4x256xf32>
    %15 = arith.mulf %13, %14 : vector<4x256xf32>
    %16 = arith.addf %10, %15 : vector<4x256xf32>
    %17 = vector.extract_strided_slice %1 {offsets = [0, 2], sizes = [4, 1], strides = [1, 1]} : vector<4x8xf32> to vector<4x1xf32>
    %18 = vector.extract_strided_slice %0 {offsets = [2, 0], sizes = [1, 256], strides = [1, 1]} : vector<8x256xf32> to vector<1x256xf32>
    %19 = vector.broadcast %17 : vector<4x1xf32> to vector<4x256xf32>
    %20 = vector.broadcast %18 : vector<1x256xf32> to vector<4x256xf32>
    %21 = arith.mulf %19, %20 : vector<4x256xf32>
    %22 = arith.addf %16, %21 : vector<4x256xf32>
    %23 = vector.extract_strided_slice %1 {offsets = [0, 3], sizes = [4, 1], strides = [1, 1]} : vector<4x8xf32> to vector<4x1xf32>
    %24 = vector.extract_strided_slice %0 {offsets = [3, 0], sizes = [1, 256], strides = [1, 1]} : vector<8x256xf32> to vector<1x256xf32>
    %25 = vector.broadcast %23 : vector<4x1xf32> to vector<4x256xf32>
    %26 = vector.broadcast %24 : vector<1x256xf32> to vector<4x256xf32>
    %27 = arith.mulf %25, %26 : vector<4x256xf32>
    %28 = arith.addf %22, %27 : vector<4x256xf32>
    %29 = vector.extract_strided_slice %1 {offsets = [0, 4], sizes = [4, 1], strides = [1, 1]} : vector<4x8xf32> to vector<4x1xf32>
    %30 = vector.extract_strided_slice %0 {offsets = [4, 0], sizes = [1, 256], strides = [1, 1]} : vector<8x256xf32> to vector<1x256xf32>
    %31 = vector.broadcast %29 : vector<4x1xf32> to vector<4x256xf32>
    %32 = vector.broadcast %30 : vector<1x256xf32> to vector<4x256xf32>
    %33 = arith.mulf %31, %32 : vector<4x256xf32>
    %34 = arith.addf %28, %33 : vector<4x256xf32>
    %35 = vector.extract_strided_slice %1 {offsets = [0, 5], sizes = [4, 1], strides = [1, 1]} : vector<4x8xf32> to vector<4x1xf32>
    %36 = vector.extract_strided_slice %0 {offsets = [5, 0], sizes = [1, 256], strides = [1, 1]} : vector<8x256xf32> to vector<1x256xf32>
    %37 = vector.broadcast %35 : vector<4x1xf32> to vector<4x256xf32>
    %38 = vector.broadcast %36 : vector<1x256xf32> to vector<4x256xf32>
    %39 = arith.mulf %37, %38 : vector<4x256xf32>
    %40 = arith.addf %34, %39 : vector<4x256xf32>
    %41 = vector.extract_strided_slice %1 {offsets = [0, 6], sizes = [4, 1], strides = [1, 1]} : vector<4x8xf32> to vector<4x1xf32>
    %42 = vector.extract_strided_slice %0 {offsets = [6, 0], sizes = [1, 256], strides = [1, 1]} : vector<8x256xf32> to vector<1x256xf32>
    %43 = vector.broadcast %41 : vector<4x1xf32> to vector<4x256xf32>
    %44 = vector.broadcast %42 : vector<1x256xf32> to vector<4x256xf32>
    %45 = arith.mulf %43, %44 : vector<4x256xf32>
    %46 = arith.addf %40, %45 : vector<4x256xf32>
    %47 = vector.extract_strided_slice %1 {offsets = [0, 7], sizes = [4, 1], strides = [1, 1]} : vector<4x8xf32> to vector<4x1xf32>
    %48 = vector.extract_strided_slice %0 {offsets = [7, 0], sizes = [1, 256], strides = [1, 1]} : vector<8x256xf32> to vector<1x256xf32>
    %49 = vector.broadcast %47 : vector<4x1xf32> to vector<4x256xf32>
    %50 = vector.broadcast %48 : vector<1x256xf32> to vector<4x256xf32>
    %51 = arith.mulf %49, %50 : vector<4x256xf32>
    %52 = arith.addf %46, %51 : vector<4x256xf32>
    %c0_5 = arith.constant 0 : index
    %c0_6 = arith.constant 0 : index
    %53 = vector.load %arg3[%c0_5, %c0_6] : memref<4x256xf32, #tpu.memory_space<vmem>>, vector<4x256xf32>
    tpu.vector_store %arg3[%c0_5, %c0_6], %52 {strides = array<i32>} : memref<4x256xf32, #tpu.memory_space<vmem>>, vector<4x256xf32>,
    return
  }
}

</mosaic_0001>

<llo_original>
// kernel: tile.8
$region0: #{tile.8}
  #allocation0 [shape = 's32[1]{0}', space=sflag, size = 0x4, scoped, tag = 'scoped memory for tile.8']
  %s0 = inlined_call_operand.vmem [shape: f32[2], index: 0, kind: input, shape index: {}]
  %s1 = inlined_call_operand.vmem [shape: f32[2,2], index: 1, kind: output, shape index: {}]
  // Predicated region
  $region2: #{tile.8} parent=0 // pred_check
    _
  $region3: #{tile.8} parent=0 // pred_check_branch
    %3 = sbr.rel (0) target = $region5
  $region4: #{tile.8} parent=0 // pred_region
    _
  $region5: #{tile.8} parent=0 // pred_fallthru
    _
  %v4 = vld [vmem:[%s0] ss:$0 sm:$0xff]
  %5 = vst [vmem:[%s1] sm:$0x3] %v4

// kernel: tile.0
$region0: #{tile.0}
  %s0 = inlined_call_operand.vmem [shape: f32[2,2], index: 0, kind: input, shape index: {}]
  %s1 = inlined_call_operand.vmem [shape: f32[4,1], index: 1, kind: output, shape index: {}]
  $region1: #{tile.0} parent=0
    #allocation0 [shape = 'u8[4096]{0}', space=vmem, size = 0x1000, scoped, tag = 'scoped mem for output reshape']
    #allocation1 [shape = 'u8[4096]{0}', space=vmem, size = 0x1000, scoped, tag = 'scoped mem for input reshape']
    %s3 = ssub.s32 4, 1
    %v4 = vld [vmem:[%s0] sm:%s3]
    %5 = vst [vmem:[#allocation1] sm:%s3] %v4
    %v6 = vld [vmem:[#allocation1] sm:$0x3]
    %vm7 = vcmask 7168
    %8 = vst.msk [vmem:[#allocation0] ss:$2 sm:$0x3] %vm7, %v6
    %v9 = vld [vmem:[#allocation1] sm:$0x3]
    %10 = vrot.lane.b32.xlu0 %v9, 127
    %v11 = vpop.permute.xlu0 %10
    %vm12 = vcmask 7168
    %s13 = scalar_lea.vmem [#allocation0], 1
    %14 = vst.msk [vmem:[%s13] ss:$2 sm:$0x3] %vm12, %v11
    %s16 = ssub.s32 16, 1
    %v17 = vld [vmem:[#allocation0] sm:%s16]
    %s19 = ssub.s32 16, 1
    %20 = vst [vmem:[%s1] sm:%s19] %v17

// kernel: align_forward.1
$region0: #{align_forward.1}
  #allocation0 [shape = 'u32[]', space=smem, size = 0x4, offset = 0x4, fixed_abs, tag = 'smem constant byte address 0x4 - core index']
  #allocation1 [shape = 'u32[72,128]{1,0:T(1,128)}', space=vmem, size = 0x9000, scoped, tag = 'internal scratch']
  %s0 = inlined_call_operand.vmem [shape: f32[8,256], index: 0, kind: input, shape index: {}]
  %s1 = inlined_call_operand.vmem [shape: f32[4,8], index: 1, kind: input, shape index: {}]
  %s2 = inlined_call_operand.vmem [shape: f32[4,1], index: 2, kind: input, shape index: {}]
  %s3 = inlined_call_operand.vmem [shape: f32[4,256], index: 3, kind: output, shape index: {}]
  %s4 = sld [smem:[#allocation0]]
  $region22: #{align_forward.1} parent=0
    _
  %s6 = ssub.s32 1, %s4
  %s7 = scalar_select 0, %s6, %s4
  // Predicated region
  $region2: #{align_forward.1} parent=0 // pred_check
    _
  $region3: #{align_forward.1} parent=0 // pred_check_branch
    %9 = sbr.rel (0) target = $region5
  $region4: #{align_forward.1} parent=0 // pred_region
    _
  $region5: #{align_forward.1} parent=0 // pred_fallthru
    _
  // Predicated region
  $region6: #{align_forward.1} parent=0 // pred_check
    _
  $region7: #{align_forward.1} parent=0 // pred_check_branch
    %11 = sbr.rel (0) target = $region9
  $region8: #{align_forward.1} parent=0 // pred_region
    _
  $region9: #{align_forward.1} parent=0 // pred_fallthru
    _
  // Predicated region
  $region10: #{align_forward.1} parent=0 // pred_check
    _
  $region11: #{align_forward.1} parent=0 // pred_check_branch
    %13 = sbr.rel (0) target = $region13
  $region12: #{align_forward.1} parent=0 // pred_region
    _
  $region13: #{align_forward.1} parent=0 // pred_fallthru
    _
  %v14 = vld [vmem:[%s0] sm:$0xff]
  %v15 = vld [vmem:[%s0 + $0x8] sm:$0xff]
  %v16 = vld [vmem:[%s1] sm:$0xf]
  %v17 = vld [vmem:[%s2] sm:$0xf]
  %19 = vset.pattern.permute.xlu0 0
  %20 = vperm.xlu0 %19, %v17
  %v21 = vpop.permute.xlu0 %20
  %24 = vset.pattern.permute.xlu0 0
  %25 = vperm.xlu0 %24, %v16
  %v26 = vpop.permute.xlu0 %25
  %v28 = vperm.slane %v14, 0
  %v29 = vperm.slane %v15, 0
  %v30 = vmul.f32 %v26, %v28
  %v31 = vmul.f32 %v26, %v29
  %v32 = vadd.f32 %v21, %v30
  %v33 = vadd.f32 %v21, %v31
  %34 = vset.pattern.permute.xlu0 1
  %35 = vperm.xlu0 %34, %v16
  %v36 = vpop.permute.xlu0 %35
  %v38 = vperm.slane %v14, 1
  %v39 = vperm.slane %v15, 1
  %v40 = vmul.f32 %v36, %v38
  %v41 = vmul.f32 %v36, %v39
  %v42 = vadd.f32 %v32, %v40
  %v43 = vadd.f32 %v33, %v41
  %44 = vset.pattern.permute.xlu0 2
  %45 = vperm.xlu0 %44, %v16
  %v46 = vpop.permute.xlu0 %45
  %v48 = vperm.slane %v14, 2
  %v49 = vperm.slane %v15, 2
  %v50 = vmul.f32 %v46, %v48
  %v51 = vmul.f32 %v46, %v49
  %v52 = vadd.f32 %v42, %v50
  %v53 = vadd.f32 %v43, %v51
  %54 = vset.pattern.permute.xlu0 3
  %55 = vperm.xlu0 %54, %v16
  %v56 = vpop.permute.xlu0 %55
  %v58 = vperm.slane %v14, 3
  %v59 = vperm.slane %v15, 3
  %v60 = vmul.f32 %v56, %v58
  %v61 = vmul.f32 %v56, %v59
  %v62 = vadd.f32 %v52, %v60
  %v63 = vadd.f32 %v53, %v61
  %64 = vset.pattern.permute.xlu0 4
  %65 = vperm.xlu0 %64, %v16
  %v66 = vpop.permute.xlu0 %65
  %v68 = vperm.slane %v14, 4
  %v69 = vperm.slane %v15, 4
  %v70 = vmul.f32 %v66, %v68
  %v71 = vmul.f32 %v66, %v69
  %v72 = vadd.f32 %v62, %v70
  %v73 = vadd.f32 %v63, %v71
  %74 = vset.pattern.permute.xlu0 5
  %75 = vperm.xlu0 %74, %v16
  %v76 = vpop.permute.xlu0 %75
  %v78 = vperm.slane %v14, 5
  %v79 = vperm.slane %v15, 5
  %v80 = vmul.f32 %v76, %v78
  %v81 = vmul.f32 %v76, %v79
  %v82 = vadd.f32 %v72, %v80
  %v83 = vadd.f32 %v73, %v81
  %84 = vset.pattern.permute.xlu0 6
  %85 = vperm.xlu0 %84, %v16
  %v86 = vpop.permute.xlu0 %85
  %v88 = vperm.slane %v14, 6
  %v89 = vperm.slane %v15, 6
  %v90 = vmul.f32 %v86, %v88
  %v91 = vmul.f32 %v86, %v89
  %v92 = vadd.f32 %v82, %v90
  %v93 = vadd.f32 %v83, %v91
  %94 = vset.pattern.permute.xlu0 7
  %95 = vperm.xlu0 %94, %v16
  %v96 = vpop.permute.xlu0 %95
  %v98 = vperm.slane %v14, 7
  %v99 = vperm.slane %v15, 7
  %v100 = vmul.f32 %v96, %v98
  %v101 = vmul.f32 %v96, %v99
  %v102 = vadd.f32 %v92, %v100
  %v103 = vadd.f32 %v93, %v101
  %v106 = vrot.slane %v103, 4
  %vm107 = vcmask 1043456
  %v108 = vsel %vm107, %v102, %v106
  %110 = vst [vmem:[%s3] sm:$0xff] %v108
  // Predicated region
  $region14: #{align_forward.1} parent=0 // pred_check
    _
  $region15: #{align_forward.1} parent=0 // pred_check_branch
    %112 = sbr.rel (0) target = $region17
  $region16: #{align_forward.1} parent=0 // pred_region
    _
  $region17: #{align_forward.1} parent=0 // pred_fallthru
    _
  // Predicated region
  $region18: #{align_forward.1} parent=0 // pred_check
    _
  $region19: #{align_forward.1} parent=0 // pred_check_branch
    %114 = sbr.rel (0) target = $region21
  $region20: #{align_forward.1} parent=0 // pred_region
    _
  $region21: #{align_forward.1} parent=0 // pred_fallthru
    _

</llo_original>
